<compile_context>
chip_gen: v7x
topology: tpu7x:2x2x1
jax: 0.10.0
libtpu: 0.0.40
codegen_flags: <defaults>
</compile_context>

<pallas_src>
import jax
import jax.numpy as jnp
from jax.experimental import pallas as pl
from jax.experimental.pallas import tpu as pltpu


def _round_up(a, m):
    return (a + m - 1) // m * m


# ----------------------------------------------------------------------------
# Kernel: one batch tile of the fully-folded forward pass.
#   x_ref : (Bt, Cin*L)        f32
#   w1    : (Cin*L, 2*P)       f32   P = round_up(140*(L-6)//2, 128)
#   b1    : (1, 2*P)           f32
#   w2    : (P, classes_pad)   f32
#   b2    : (1, classes_pad)   f32
#   out   : (Bt, classes_pad)  f32
# ----------------------------------------------------------------------------
def cnn_kernel(x_ref, w1_ref, b1_ref, w2_ref, b2_ref, out_ref):
    half = w1_ref.shape[1] // 2                     # = P (multiple of 128)
    # Folded conv stack: one MXU pass.
    h = jnp.dot(x_ref[...], w1_ref[...],
                preferred_element_type=jnp.float32) + b1_ref[...]
    # MaxPool1d(2): max of the two taps; 512-aligned lane slices -> no shuffle.
    pooled = jnp.maximum(h[:, :half], h[:, half:])
    # Folded c22 -> flatten -> fc1 -> fc2: one MXU pass.
    out = jnp.dot(pooled, w2_ref[...],
                  preferred_element_type=jnp.float32) + b2_ref[...]
    out_ref[...] = out.astype(out_ref.dtype)


# ----------------------------------------------------------------------------
# Parameter init mimicking PyTorch's uniform(-1/sqrt(fan_in), 1/sqrt(fan_in)).
# ----------------------------------------------------------------------------
def init_params(key, in_chan, classes):
    keys = jax.random.split(key, 12)

    def u(k, shape, fan_in):
        bound = 1.0 / jnp.sqrt(jnp.float32(fan_in))
        return jax.random.uniform(k, shape, jnp.float32, -bound, bound)

    w11 = u(keys[0], (120, in_chan, 3), in_chan * 3)
    b11 = u(keys[1], (120,), in_chan * 3)
    w21 = u(keys[2], (130, 120, 3), 120 * 3)
    b21 = u(keys[3], (130,), 120 * 3)
    w12 = u(keys[4], (140, 130, 3), 130 * 3)
    b12 = u(keys[5], (140,), 130 * 3)
    w22 = u(keys[6], (64, 140, 1), 140 * 1)
    b22 = u(keys[7], (64,), 140 * 1)
    fc1w = u(keys[8], (128, 64 * 3), 64 * 3)
    fc1b = u(keys[9], (128,), 64 * 3)
    fc2w = u(keys[10], (classes, 128), 128)
    fc2b = u(keys[11], (classes,), 128)
    return (w11, b11, w21, b21, w12, b12, w22, b22, fc1w, fc1b, fc2w, fc2b)


# ----------------------------------------------------------------------------
# Wrapper-side exact folding (pure JAX, f32).  The whole net except the max
# pool is affine, so each half is recovered by pushing a basis through it.
# ----------------------------------------------------------------------------
def _fold_params(params, in_chan, L, classes, cp, tap_pad):
    (w11, b11, w21, b21, w12, b12, w22, b22, fc1w, fc1b, fc2w, fc2b) = params
    l_out = L - 6
    lp = l_out // 2
    c_conv = 140

    def conv1d(x, w, b):                      # x: (N, Cin, L), w: (Cout, Cin, K)
        k = w.shape[2]
        lo = x.shape[2] - k + 1
        cols = jnp.stack([x[:, :, j:j + lo] for j in range(k)], axis=-1)
        return jnp.einsum('bilk,oik->bol', cols, w) + b[None, :, None]

    def conv_stack(x):
        return conv1d(conv1d(conv1d(x, w11, b11), w21, b21), w12, b12)

    # --- fold c11∘c21∘c12 : (Cin*L) -> (2, tap_pad) arranged for the pool ---
    n_in = in_chan * L
    basis = jnp.concatenate(
        [jnp.zeros((1, n_in), jnp.float32), jnp.eye(n_in, dtype=jnp.float32)], 0)
    hb = conv_stack(basis.reshape(n_in + 1, in_chan, L))      # (n_in+1, 140, l_out)

    def arrange(h):                           # (N, 140, l_out) -> (N, 2*tap_pad)
        n = h.shape[0]
        g = h.reshape(n, c_conv, lp, 2)                       # (N, c, l_p, tap)
        g = jnp.transpose(g, (0, 3, 2, 1)).reshape(n, 2, lp * c_conv)
        g = jnp.pad(g, ((0, 0), (0, 0), (0, tap_pad - lp * c_conv)))
        return g.reshape(n, 2 * tap_pad)

    hb = arrange(hb)
    b1 = hb[0]
    w1 = hb[1:] - b1[None, :]                                  # (n_in, 2*tap_pad)

    # --- fold c22 -> flatten(c-major) -> fc1 -> fc2 : (lp*140) -> classes ----
    def head(p):                              # p: (N, 140, lp)
        q = jnp.einsum('ncl,oc->nol', p, w22[:, :, 0]) + b22[None, :, None]
        flat = q.reshape(p.shape[0], 64 * lp)                  # torch .view order
        return (flat @ fc1w.T + fc1b) @ fc2w.T + fc2b

    n_mid = lp * c_conv
    basis2 = jnp.concatenate(
        [jnp.zeros((1, n_mid), jnp.float32), jnp.eye(n_mid, dtype=jnp.float32)], 0)
    # pooled lane index j = l_p*140 + c  maps to tensor element p[c, l_p]
    p_basis = jnp.transpose(basis2.reshape(n_mid + 1, lp, c_conv), (0, 2, 1))
    hh = head(p_basis)                                         # (n_mid+1, classes)
    b2 = hh[0]
    w2 = hh[1:] - b2[None, :]                                  # (n_mid, classes)
    w2 = jnp.pad(w2, ((0, tap_pad - n_mid), (0, cp - classes)))
    b2 = jnp.pad(b2, (0, cp - classes))

    return (w1.astype(jnp.float32), b1.reshape(1, -1).astype(jnp.float32),
            w2.astype(jnp.float32), b2.reshape(1, -1).astype(jnp.float32))


def _num_batch_tiles():
    """2 parallel tiles on megacore parts (v7x / v4), else a single tile."""
    try:
        kind = jax.devices()[0].device_kind.lower()
    except Exception:
        return 1
    return 2 if ("v7" in kind or "v4" in kind) else 1


# ----------------------------------------------------------------------------
# Forward pass.  x_ncl: (B, in_chan, L) float32  (PyTorch Conv1d NCW layout).
# ----------------------------------------------------------------------------
def cnn_forward(x_ncl, params, *, num_tiles=None, max_block_b=256):
    fc1w = params[8]
    B, cin, L = x_ncl.shape
    classes = params[10].shape[0]
    assert (L - 6) % 2 == 0, "maxpool assumes even conv-output length"
    lp = (L - 6) // 2
    assert lp * 64 == fc1w.shape[1], "input length inconsistent with fc1 (need L=12)"

    n_in = cin * L
    cp = _round_up(classes, 128)              # lane-dense output
    tap_pad = _round_up(lp * 140, 128)        # 420 -> 512 per pool tap

    # --- exact f32 folding of all linear layers (wrapper-side, tiny) ---------
    w1, b1, w2, b2 = _fold_params(params, cin, L, classes, cp, tap_pad)

    # --- batch tiling: 1 tile (v5e/v6e) or 2 parallel tiles (megacore) -------
    n_tiles = _num_batch_tiles() if num_tiles is None else num_tiles
    b8 = _round_up(B, 8)
    block_b = min(_round_up(-(-b8 // n_tiles), 8), max_block_b)
    nb = pl.cdiv(b8, block_b)
    b_pad = nb * block_b

    # --- lane-friendly 2D input: (B, Cin*L) ----------------------------------
    x2d = x_ncl.reshape(B, n_in).astype(jnp.float32)
    if b_pad != B:
        x2d = jnp.pad(x2d, ((0, b_pad - B), (0, 0)))

    in_specs = [
        pl.BlockSpec((block_b, n_in), lambda i: (i, 0)),
        pl.BlockSpec(w1.shape, lambda i: (0, 0)),   # VMEM-resident weights
        pl.BlockSpec(b1.shape, lambda i: (0, 0)),
        pl.BlockSpec(w2.shape, lambda i: (0, 0)),
        pl.BlockSpec(b2.shape, lambda i: (0, 0)),
    ]
    out_specs = pl.BlockSpec((block_b, cp), lambda i: (i, 0))

    flops = 2 * b_pad * (n_in * 2 * tap_pad + tap_pad * cp)
    bytes_accessed = (b_pad * n_in * 4 + b_pad * cp * 4
                      + 4 * (w1.size + b1.size + w2.size + b2.size))
    cost = pl.CostEstimate(flops=int(flops), transcendentals=0,
                           bytes_accessed=int(bytes_accessed))

    out = pl.pallas_call(
        cnn_kernel,
        out_shape=jax.ShapeDtypeStruct((b_pad, cp), jnp.float32),
        grid_spec=pltpu.PrefetchScalarGridSpec(
            num_scalar_prefetch=0,
            grid=(nb,),
            in_specs=in_specs,
            out_specs=out_specs),
        compiler_params=pltpu.CompilerParams(
            dimension_semantics=("parallel",),         # megacore splits the batch
            vmem_limit_bytes=8 * 1024 * 1024),         # tiny working set
        cost_estimate=cost,
    )(x2d, w1, b1, w2, b2)

    return out[:B, :classes]


# ----------------------------------------------------------------------------
# Pure-JAX f32 reference matching the PyTorch module exactly.
# ----------------------------------------------------------------------------
def cnn_reference(x_ncl, params):
    (w11, b11, w21, b21, w12, b12, w22, b22, fc1w, fc1b, fc2w, fc2b) = params

    def conv1d(x, w, b):
        k = w.shape[2]
        lo = x.shape[2] - k + 1
        cols = jnp.stack([x[:, :, j:j + lo] for j in range(k)], axis=-1)
        return jnp.einsum('bilk,oik->bol', cols, w) + b[None, :, None]

    h = conv1d(x_ncl, w11, b11)
    h = conv1d(h, w21, b21)
    h = conv1d(h, w12, b12)
    B, C, Lh = h.shape
    h = jnp.max(h.reshape(B, C, Lh // 2, 2), axis=-1)          # MaxPool1d(2)
    h = conv1d(h, w22, b22)                                    # k=1 conv
    flat = h.reshape(B, -1)                                    # (C, L) flatten
    f1 = flat @ fc1w.T + fc1b
    return f1 @ fc2w.T + fc2b


if __name__ == "__main__":
    key = jax.random.PRNGKey(0)
    in_chan, classes = 4, 5
    B, L = 64, 12            # L=12 -> (L-6)//2 = 3, matches fc1's 64*3 input
    pkey, xkey = jax.random.split(key)
    params = init_params(pkey, in_chan, classes)
    x = jax.random.normal(xkey, (B, in_chan, L), jnp.float32)

    out = cnn_forward(x, params)
    jax.block_until_ready(out)
    assert out.shape == (B, classes)

    ref = cnn_reference(x, params)
    err = float(jnp.max(jnp.abs(out - ref)))
    scale = float(jnp.max(jnp.abs(ref)))
    assert err <= 1e-2 + 1e-2 * scale, f"mismatch: err={err}, scale={scale}"

    print("KERNEL_OK")
</pallas_src>

<mosaic_0001>
module attributes {stable_mosaic.version = 11 : i64} {
  func.func @cnn_kernel(%arg0: i32, %arg1: memref<64x48xf32, #tpu.memory_space<vmem>>, %arg2: memref<48x1024xf32, #tpu.memory_space<vmem>>, %arg3: memref<1x1024xf32, #tpu.memory_space<vmem>>, %arg4: memref<512x128xf32, #tpu.memory_space<vmem>>, %arg5: memref<1x128xf32, #tpu.memory_space<vmem>>, %arg6: memref<64x128xf32, #tpu.memory_space<vmem>>) attributes {dimension_semantics = [#tpu.dimension_semantics<parallel>], iteration_bounds = array<i64: 1>, scalar_prefetch = 0 : i64, scratch_operands = 0 : i64, tpu.core_type = #tpu.core_type<tc>, window_params = [{transform_indices = @transform_0, window_bounds = array<i64: 64, 48>}, {pipeline_mode = #tpu.pipeline_mode<synchronous>, transform_indices = @transform_1, window_bounds = array<i64: 48, 1024>}, {pipeline_mode = #tpu.pipeline_mode<synchronous>, transform_indices = @transform_2, window_bounds = array<i64: 1, 1024>}, {pipeline_mode = #tpu.pipeline_mode<synchronous>, transform_indices = @transform_3, window_bounds = array<i64: 512, 128>}, {pipeline_mode = #tpu.pipeline_mode<synchronous>, transform_indices = @transform_4, window_bounds = array<i64: 1, 128>}, {transform_indices = @transform_5, window_bounds = array<i64: 64, 128>}]} {
    %c0 = arith.constant 0 : index
    %c0_0 = arith.constant 0 : index
    %0 = vector.load %arg1[%c0, %c0_0] : memref<64x48xf32, #tpu.memory_space<vmem>>, vector<64x48xf32>
    %c0_1 = arith.constant 0 : index
    %c0_2 = arith.constant 0 : index
    %1 = vector.load %arg2[%c0_1, %c0_2] : memref<48x1024xf32, #tpu.memory_space<vmem>>, vector<48x1024xf32>
    %cst = arith.constant dense<0.000000e+00> : vector<64x1024xf32>
    %2 = tpu.matmul %0, %1, %cst {dimension_numbers = #tpu.dot_dimension_numbers<[1], [0], [0], [1], [0, 0, 1, 1], [], []>} : vector<64x48xf32>, vector<48x1024xf32>, vector<64x1024xf32> -> vector<64x1024xf32>
    %c0_3 = arith.constant 0 : index
    %c0_4 = arith.constant 0 : index
    %3 = vector.load %arg3[%c0_3, %c0_4] : memref<1x1024xf32, #tpu.memory_space<vmem>>, vector<1x1024xf32>
    %4 = vector.broadcast %3 : vector<1x1024xf32> to vector<64x1024xf32>
    %5 = arith.addf %2, %4 : vector<64x1024xf32>
    %6 = vector.extract_strided_slice %5 {offsets = [0, 0], sizes = [64, 512], strides = [1, 1]} : vector<64x1024xf32> to vector<64x512xf32>
    %7 = vector.extract_strided_slice %5 {offsets = [0, 512], sizes = [64, 512], strides = [1, 1]} : vector<64x1024xf32> to vector<64x512xf32>
    %8 = arith.maximumf %6, %7 : vector<64x512xf32>
    %c0_5 = arith.constant 0 : index
    %c0_6 = arith.constant 0 : index
    %9 = vector.load %arg4[%c0_5, %c0_6] : memref<512x128xf32, #tpu.memory_space<vmem>>, vector<512x128xf32>
    %cst_7 = arith.constant dense<0.000000e+00> : vector<64x128xf32>
    %10 = tpu.matmul %8, %9, %cst_7 {dimension_numbers = #tpu.dot_dimension_numbers<[1], [0], [0], [1], [0, 0, 1, 1], [], []>} : vector<64x512xf32>, vector<512x128xf32>, vector<64x128xf32> -> vector<64x128xf32>
    %c0_8 = arith.constant 0 : index
    %c0_9 = arith.constant 0 : index
    %11 = vector.load %arg5[%c0_8, %c0_9] : memref<1x128xf32, #tpu.memory_space<vmem>>, vector<1x128xf32>
    %12 = vector.broadcast %11 : vector<1x128xf32> to vector<64x128xf32>
    %13 = arith.addf %10, %12 : vector<64x128xf32>
    %c0_10 = arith.constant 0 : index
    %c0_11 = arith.constant 0 : index
    %14 = vector.load %arg6[%c0_10, %c0_11] : memref<64x128xf32, #tpu.memory_space<vmem>>, vector<64x128xf32>
    tpu.vector_store %arg6[%c0_10, %c0_11], %13 {strides = array<i32>} : memref<64x128xf32, #tpu.memory_space<vmem>>, vector<64x128xf32>,
    return
  }
  func.func @transform_0(%arg0: i32) -> (i32, i32) {
    %c0_i32 = arith.constant 0 : i32
    %c0_i32_0 = arith.constant 0 : i32
    return %arg0, %c0_i32 : i32, i32
  }
  func.func @transform_1(%arg0: i32) -> (i32, i32) {
    %c0_i32 = arith.constant 0 : i32
    %c0_i32_0 = arith.constant 0 : i32
    %c0_i32_1 = arith.constant 0 : i32
    return %c0_i32, %c0_i32_0 : i32, i32
  }
  func.func @transform_2(%arg0: i32) -> (i32, i32) {
    %c0_i32 = arith.constant 0 : i32
    %c0_i32_0 = arith.constant 0 : i32
    %c0_i32_1 = arith.constant 0 : i32
    return %c0_i32, %c0_i32_0 : i32, i32
  }
  func.func @transform_3(%arg0: i32) -> (i32, i32) {
    %c0_i32 = arith.constant 0 : i32
    %c0_i32_0 = arith.constant 0 : i32
    %c0_i32_1 = arith.constant 0 : i32
    return %c0_i32, %c0_i32_0 : i32, i32
  }
  func.func @transform_4(%arg0: i32) -> (i32, i32) {
    %c0_i32 = arith.constant 0 : i32
    %c0_i32_0 = arith.constant 0 : i32
    %c0_i32_1 = arith.constant 0 : i32
    return %c0_i32, %c0_i32_0 : i32, i32
  }
  func.func @transform_5(%arg0: i32) -> (i32, i32) {
    %c0_i32 = arith.constant 0 : i32
    %c0_i32_0 = arith.constant 0 : i32
    return %arg0, %c0_i32 : i32, i32
  }
}

</mosaic_0001>

<llo_original>
// kernel: tpu_custom_call.1
$region0: #{tpu_custom_call.1}
  #allocation0 [shape = 'u32[]', space=smem, size = 0x4, offset = 0x4, fixed_abs, tag = 'smem constant byte address 0x4 - core index']
  #allocation1 [shape = 'u32[144,128]{1,0:T(1,128)}', space=vmem, size = 0x12000, scoped, tag = 'internal scratch']
  %s0 = inlined_call_operand.vmem [shape: f32[64,48], index: 0, kind: input, shape index: {}]
  %s1 = inlined_call_operand.hbm [shape: f32[48,1024], index: 1, kind: input, shape index: {}]
  %s2 = inlined_call_operand.vmem [shape: f32[1,1024], index: 2, kind: input, shape index: {}]
  %s3 = inlined_call_operand.hbm [shape: f32[512,128], index: 3, kind: input, shape index: {}]
  %s4 = inlined_call_operand.vmem [shape: f32[1,128], index: 4, kind: input, shape index: {}]
  %s5 = inlined_call_operand.hbm [shape: f32[64,128], index: 5, kind: output, shape index: {}]
  %s6 = sld [smem:[#allocation0]]
  $region38: #{tpu_custom_call.1} parent=0
    _
  %s8 = ssub.s32 1, %s6
  %s9 = scalar_select 0, %s8, %s6
  $region1: #{tpu_custom_call.1} parent=0
    #allocation2 [shape = 'u8[196608]{0}', space=vmem, size = 0x30000, scoped, tag = 'input window, operand 1, single buffered']
    #allocation3 [shape = 's32[1]{0}', space=sflag, size = 0x4, scoped, tag = 'scoped memory for tpu_custom_call.1']
    #allocation4 [shape = 's32[1]{0}', space=sflag, size = 0x4, scoped, tag = 'scoped memory for tpu_custom_call.1']
    #allocation5 [shape = 'u8[262144]{0}', space=vmem, size = 0x40000, scoped, tag = 'input window, operand 3, single buffered']
    #allocation6 [shape = 's32[1]{0}', space=sflag, size = 0x4, scoped, tag = 'scoped memory for tpu_custom_call.1']
    #allocation7 [shape = 'u8[32768]{0}', space=vmem, size = 0x8000, scoped, tag = 'output window, operand 0, single buffered']
    %10 = vsyncpa [#allocation3], 0
    %11 = vsyncpa [#allocation6], 0
    %12 = vsyncpa [#allocation4], 0
    // Predicated region
    $region2: #{tpu_custom_call.1} parent=1 // pred_check
      _
    $region3: #{tpu_custom_call.1} parent=1 // pred_check_branch
      %14 = sbr.rel (0) target = $region5
    $region4: #{tpu_custom_call.1} parent=1 // pred_region
      _
    $region5: #{tpu_custom_call.1} parent=1 // pred_fallthru
      _
    // Predicated region
    $region6: #{tpu_custom_call.1} parent=1 // pred_check
      _
    $region7: #{tpu_custom_call.1} parent=1 // pred_check_branch
      %16 = sbr.rel (0) target = $region9
    $region8: #{tpu_custom_call.1} parent=1 // pred_region
      %s18 = ssub.s32 6144, 6144
      %19 = vsyncadd [#allocation3], %s18
      %s20 = sshll.u32 [#allocation2], 4
      %s21 = int_to_ptr.vmem [resolvable:$true] %s20
      %26 = dma.hbm_to_vmem [thread:$0]  %s1, 6144, %s21, [#allocation3], 1024, 1024, 64
    $region9: #{tpu_custom_call.1} parent=1 // pred_fallthru
      _
    // Predicated region
    $region10: #{tpu_custom_call.1} parent=1 // pred_check
      _
    $region11: #{tpu_custom_call.1} parent=1 // pred_check_branch
      %28 = sbr.rel (0) target = $region13
    $region12: #{tpu_custom_call.1} parent=1 // pred_region
      _
    $region13: #{tpu_custom_call.1} parent=1 // pred_fallthru
      _
    // Predicated region
    $region14: #{tpu_custom_call.1} parent=1 // pred_check
      _
    $region15: #{tpu_custom_call.1} parent=1 // pred_check_branch
      %30 = sbr.rel (0) target = $region17
    $region16: #{tpu_custom_call.1} parent=1 // pred_region
      %s32 = ssub.s32 8192, 8192
      %33 = vsyncadd [#allocation6], %s32
      %s34 = sshll.u32 [#allocation5], 4
      %s35 = int_to_ptr.vmem [resolvable:$true] %s34
      %40 = dma.hbm_to_vmem [thread:$0]  %s3, 8192, %s35, [#allocation6], 128, 128, 8
    $region17: #{tpu_custom_call.1} parent=1 // pred_fallthru
      _
    // Predicated region
    $region18: #{tpu_custom_call.1} parent=1 // pred_check
      _
    $region19: #{tpu_custom_call.1} parent=1 // pred_check_branch
      %42 = sbr.rel (0) target = $region21
    $region20: #{tpu_custom_call.1} parent=1 // pred_region
      _
    $region21: #{tpu_custom_call.1} parent=1 // pred_fallthru
      _
    // Predicated region
    $region22: #{tpu_custom_call.1} parent=1 // pred_check
      _
    $region23: #{tpu_custom_call.1} parent=1 // pred_check_branch
      %44 = sbr.rel (0) target = $region25
    $region24: #{tpu_custom_call.1} parent=1 // pred_region
      %45 = dma.done [#allocation3], 6144
    $region25: #{tpu_custom_call.1} parent=1 // pred_fallthru
      _
    // Predicated region
    $region26: #{tpu_custom_call.1} parent=1 // pred_check
      _
    $region27: #{tpu_custom_call.1} parent=1 // pred_check_branch
      %47 = sbr.rel (0) target = $region29
    $region28: #{tpu_custom_call.1} parent=1 // pred_region
      %48 = dma.done [#allocation6], 8192
    $region29: #{tpu_custom_call.1} parent=1 // pred_fallthru
      _
    %v49 = vld [vmem:[%s0] sm:$0xff]
    %v50 = vld [vmem:[%s0 + $0x8] sm:$0xff]
    %v51 = vld [vmem:[%s0 + $0x10] sm:$0xff]
    %v52 = vld [vmem:[%s0 + $0x18] sm:$0xff]
    %v53 = vld [vmem:[%s0 + $0x20] sm:$0xff]
    %v54 = vld [vmem:[%s0 + $0x28] sm:$0xff]
    %v55 = vld [vmem:[%s0 + $0x30] sm:$0xff]
    %v56 = vld [vmem:[%s0 + $0x38] sm:$0xff]
    %v57 = vld [vmem:[#allocation2] sm:$0xff]
    %v58 = vld [vmem:[#allocation2 + $0x8] sm:$0xff]
    %v59 = vld [vmem:[#allocation2 + $0x10] sm:$0xff]
    %v60 = vld [vmem:[#allocation2 + $0x18] sm:$0xff]
    %v61 = vld [vmem:[#allocation2 + $0x20] sm:$0xff]
    %v62 = vld [vmem:[#allocation2 + $0x28] sm:$0xff]
    %v63 = vld [vmem:[#allocation2 + $0x30] sm:$0xff]
    %v64 = vld [vmem:[#allocation2 + $0x38] sm:$0xff]
    %v65 = vld [vmem:[#allocation2 + $0x40] sm:$0xff]
    %v66 = vld [vmem:[#allocation2 + $0x48] sm:$0xff]
    %v67 = vld [vmem:[#allocation2 + $0x50] sm:$0xff]
    %v68 = vld [vmem:[#allocation2 + $0x58] sm:$0xff]
    %v69 = vld [vmem:[#allocation2 + $0x60] sm:$0xff]
    %v70 = vld [vmem:[#allocation2 + $0x68] sm:$0xff]
    %v71 = vld [vmem:[#allocation2 + $0x70] sm:$0xff]
    %v72 = vld [vmem:[#allocation2 + $0x78] sm:$0xff]
    %v73 = vld [vmem:[#allocation2 + $0x80] sm:$0xff]
    %v74 = vld [vmem:[#allocation2 + $0x88] sm:$0xff]
    %v75 = vld [vmem:[#allocation2 + $0x90] sm:$0xff]
    %v76 = vld [vmem:[#allocation2 + $0x98] sm:$0xff]
    %v77 = vld [vmem:[#allocation2 + $0xa0] sm:$0xff]
    %v78 = vld [vmem:[#allocation2 + $0xa8] sm:$0xff]
    %v79 = vld [vmem:[#allocation2 + $0xb0] sm:$0xff]
    %v80 = vld [vmem:[#allocation2 + $0xb8] sm:$0xff]
    %v81 = vld [vmem:[#allocation2 + $0xc0] sm:$0xff]
    %v82 = vld [vmem:[#allocation2 + $0xc8] sm:$0xff]
    %v83 = vld [vmem:[#allocation2 + $0xd0] sm:$0xff]
    %v84 = vld [vmem:[#allocation2 + $0xd8] sm:$0xff]
    %v85 = vld [vmem:[#allocation2 + $0xe0] sm:$0xff]
    %v86 = vld [vmem:[#allocation2 + $0xe8] sm:$0xff]
    %v87 = vld [vmem:[#allocation2 + $0xf0] sm:$0xff]
    %v88 = vld [vmem:[#allocation2 + $0xf8] sm:$0xff]
    %v89 = vld [vmem:[#allocation2 + $0x100] sm:$0xff]
    %v90 = vld [vmem:[#allocation2 + $0x108] sm:$0xff]
    %v91 = vld [vmem:[#allocation2 + $0x110] sm:$0xff]
    %v92 = vld [vmem:[#allocation2 + $0x118] sm:$0xff]
    %v93 = vld [vmem:[#allocation2 + $0x120] sm:$0xff]
    %v94 = vld [vmem:[#allocation2 + $0x128] sm:$0xff]
    %v95 = vld [vmem:[#allocation2 + $0x130] sm:$0xff]
    %v96 = vld [vmem:[#allocation2 + $0x138] sm:$0xff]
    %v97 = vld [vmem:[#allocation2 + $0x140] sm:$0xff]
    %v98 = vld [vmem:[#allocation2 + $0x148] sm:$0xff]
    %v99 = vld [vmem:[#allocation2 + $0x150] sm:$0xff]
    %v100 = vld [vmem:[#allocation2 + $0x158] sm:$0xff]
    %v101 = vld [vmem:[#allocation2 + $0x160] sm:$0xff]
    %v102 = vld [vmem:[#allocation2 + $0x168] sm:$0xff]
    %v103 = vld [vmem:[#allocation2 + $0x170] sm:$0xff]
    %v104 = vld [vmem:[#allocation2 + $0x178] sm:$0xff]
    %v105 = vld [vmem:[%s2] sm:$0xff]
    %v107 = vlaneseq
    %v108 = vshrl.u32 %v107, 7
    %v109 = vsub.s32 0, %v108
    %v110 = vrot.slane %v105, %v109
    %v111 = vlaneseq
    %v112 = vshrl.u32 %v111, 7
    %v113 = vsub.s32 1, %v112
    %v114 = vrot.slane %v105, %v113
    %v115 = vlaneseq
    %v116 = vshrl.u32 %v115, 7
    %v117 = vsub.s32 2, %v116
    %v118 = vrot.slane %v105, %v117
    %v119 = vlaneseq
    %v120 = vshrl.u32 %v119, 7
    %v121 = vsub.s32 3, %v120
    %v122 = vrot.slane %v105, %v121
    %v123 = vlaneseq
    %v124 = vshrl.u32 %v123, 7
    %v125 = vsub.s32 4, %v124
    %v126 = vrot.slane %v105, %v125
    %v127 = vlaneseq
    %v128 = vshrl.u32 %v127, 7
    %v129 = vsub.s32 5, %v128
    %v130 = vrot.slane %v105, %v129
    %v131 = vlaneseq
    %v132 = vshrl.u32 %v131, 7
    %v133 = vsub.s32 6, %v132
    %v134 = vrot.slane %v105, %v133
    %v135 = vlaneseq
    %v136 = vshrl.u32 %v135, 7
    %v137 = vsub.s32 7, %v136
    %v138 = vrot.slane %v105, %v137
    %vm147 = vcmask 392192
    %v149 = vsel %vm147, %v49, 0
    %v152 = vsel %vm147, %v50, 0
    %v155 = vsel %vm147, %v51, 0
    %v158 = vsel %vm147, %v52, 0
    %v161 = vsel %vm147, %v53, 0
    %v164 = vsel %vm147, %v54, 0
    %v167 = vsel %vm147, %v55, 0
    %v170 = vsel %vm147, %v56, 0
    %172 = vmatprep.subr.mxu0 %v58
    %173 = vmatpush1.msra.mxu0 %v57
    %174 = vmatprep.subr.mxu0 %v66
    %175 = vmatpush1.msra.mxu0 %v65
    %176 = vmatprep.subr.mxu0 %v74
    %177 = vmatpush1.msra.mxu0 %v73
    %178 = vmatprep.subr.mxu0 %v82
    %179 = vmatpush1.msra.mxu0 %v81
    %180 = vmatprep.subr.mxu0 %v90
    %181 = vmatpush1.msra.mxu0 %v89
    %182 = vmatprep.subr.mxu0 %v98
    %183 = vmatpush1.msra.mxu0 %v97
    %184 = vmatprep.subr.mxu0 0.0
    %185 = vmatpush1.msra.mxu0 0.0
    %186 = vmatprep.subr.mxu0 0.0
    %187 = vmatpush1.msra.mxu0 0.0
    %188 = vmatprep.subr.mxu0 0.0
    %189 = vmatpush1.msra.mxu0 0.0
    %190 = vmatprep.subr.mxu0 0.0
    %191 = vmatpush1.msra.mxu0 0.0
    %192 = vmatprep.subr.mxu0 0.0
    %193 = vmatpush1.msra.mxu0 0.0
    %194 = vmatprep.subr.mxu0 0.0
    %195 = vmatpush1.msra.mxu0 0.0
    %196 = vmatprep.subr.mxu0 0.0
    %197 = vmatpush1.msra.mxu0 0.0
    %198 = vmatprep.subr.mxu0 0.0
    %199 = vmatpush1.msra.mxu0 0.0
    %200 = vmatprep.subr.mxu0 0.0
    %201 = vmatpush1.msra.mxu0 0.0
    %202 = vmatprep.subr.mxu0 0.0
    %203 = vmatpush1.msra.mxu0 0.0
    %204 = vmatprep.subr.mxu0 0.0
    %205 = vmatpush1.msra.mxu0 0.0
    %206 = vmatprep.subr.mxu0 0.0
    %207 = vmatpush1.msra.mxu0 0.0
    %208 = vmatprep.subr.mxu0 0.0
    %209 = vmatpush1.msra.mxu0 0.0
    %210 = vmatprep.subr.mxu0 0.0
    %211 = vmatpush1.msra.mxu0 0.0
    %212 = vmatprep.subr.mxu0 0.0
    %213 = vmatpush1.msra.mxu0 0.0
    %214 = vmatprep.subr.mxu0 0.0
    %215 = vmatpush1.msra.mxu0 0.0
    %216 = vmatprep.subr.mxu0 0.0
    %217 = vmatpush1.msra.mxu0 0.0
    %218 = vmatprep.subr.mxu0 0.0
    %219 = vmatpush1.msra.mxu0 0.0
    %220 = vmatprep.subr.mxu0 0.0
    %221 = vmatpush1.msra.mxu0 0.0
    %222 = vmatprep.subr.mxu0 0.0
    %223 = vmatpush1.msra.mxu0 0.0
    %224 = vmatprep.subr.mxu0 0.0
    %225 = vmatpush1.msra.mxu0 0.0
    %226 = vmatprep.subr.mxu0 0.0
    %227 = vmatpush1.msra.mxu0 0.0
    %228 = vmatprep.subr.mxu0 0.0
    %229 = vmatpush1.msra.mxu0 0.0
    %230 = vmatprep.subr.mxu0 0.0
    %231 = vmatpush1.msra.mxu0 0.0
    %232 = vmatprep.subr.mxu0 0.0
    %233 = vmatpush1.msra.mxu0 0.0
    %234 = vmatprep.subr.mxu0 0.0
    %235 = vmatpush1.msra.mxu0 0.0
    %236 = vmatprep.mubr.f32.mxu0 0.0
    %237 = vmatmul.mubr.f32.gmra.mrb[0].mxu0 %v149
    %v238 = vpop.f32.mrb[0].mxu0
    %v239 = vadd.f32 %v110, %v238
    %v240 = vpop.f32.mrb[0].mxu0
    %v241 = vadd.f32 %v114, %v240
    %242 = vmatprep.mubr.f32.mxu0 0.0
    %243 = vmatmul.mubr.f32.gmra.mrb[0].mxu0 %v152
    %v244 = vpop.f32.mrb[0].mxu0
    %v245 = vadd.f32 %v110, %v244
    %v246 = vpop.f32.mrb[0].mxu0
    %v247 = vadd.f32 %v114, %v246
    %248 = vmatprep.mubr.f32.mxu0 0.0
    %249 = vmatmul.mubr.f32.gmra.mrb[0].mxu0 %v155
    %v250 = vpop.f32.mrb[0].mxu0
    %v251 = vadd.f32 %v110, %v250
    %v252 = vpop.f32.mrb[0].mxu0
    %v253 = vadd.f32 %v114, %v252
    %254 = vmatprep.mubr.f32.mxu0 0.0
    %255 = vmatmul.mubr.f32.gmra.mrb[0].mxu0 %v158
    %v256 = vpop.f32.mrb[0].mxu0
    %v257 = vadd.f32 %v110, %v256
    %v258 = vpop.f32.mrb[0].mxu0
    %v259 = vadd.f32 %v114, %v258
    %260 = vmatprep.mubr.f32.mxu0 0.0
    %261 = vmatmul.mubr.f32.gmra.mrb[0].mxu0 %v161
    %v262 = vpop.f32.mrb[0].mxu0
    %v263 = vadd.f32 %v110, %v262
    %v264 = vpop.f32.mrb[0].mxu0
    %v265 = vadd.f32 %v114, %v264
    %266 = vmatprep.mubr.f32.mxu0 0.0
    %267 = vmatmul.mubr.f32.gmra.mrb[0].mxu0 %v164
    %v268 = vpop.f32.mrb[0].mxu0
    %v269 = vadd.f32 %v110, %v268
    %v270 = vpop.f32.mrb[0].mxu0
    %v271 = vadd.f32 %v114, %v270
    %272 = vmatprep.mubr.f32.mxu0 0.0
    %273 = vmatmul.mubr.f32.gmra.mrb[0].mxu0 %v167
    %v274 = vpop.f32.mrb[0].mxu0
    %v275 = vadd.f32 %v110, %v274
    %v276 = vpop.f32.mrb[0].mxu0
    %v277 = vadd.f32 %v114, %v276
    %278 = vmatprep.mubr.f32.mxu0 0.0
    %279 = vmatmul.mubr.f32.gmra.mrb[0].mxu0 %v170
    %v280 = vpop.f32.mrb[0].mxu0
    %v281 = vadd.f32 %v110, %v280
    %v282 = vpop.f32.mrb[0].mxu0
    %v283 = vadd.f32 %v114, %v282
    %284 = vdwg.mxu0
    %285 = vmatprep.subr.mxu0 %v60
    %286 = vmatpush1.msra.mxu0 %v59
    %287 = vmatprep.subr.mxu0 %v68
    %288 = vmatpush1.msra.mxu0 %v67
    %289 = vmatprep.subr.mxu0 %v76
    %290 = vmatpush1.msra.mxu0 %v75
    %291 = vmatprep.subr.mxu0 %v84
    %292 = vmatpush1.msra.mxu0 %v83
    %293 = vmatprep.subr.mxu0 %v92
    %294 = vmatpush1.msra.mxu0 %v91
    %295 = vmatprep.subr.mxu0 %v100
    %296 = vmatpush1.msra.mxu0 %v99
    %297 = vmatprep.subr.mxu0 0.0
    %298 = vmatpush1.msra.mxu0 0.0
    %299 = vmatprep.subr.mxu0 0.0
    %300 = vmatpush1.msra.mxu0 0.0
    %301 = vmatprep.subr.mxu0 0.0
    %302 = vmatpush1.msra.mxu0 0.0
    %303 = vmatprep.subr.mxu0 0.0
    %304 = vmatpush1.msra.mxu0 0.0
    %305 = vmatprep.subr.mxu0 0.0
    %306 = vmatpush1.msra.mxu0 0.0
    %307 = vmatprep.subr.mxu0 0.0
    %308 = vmatpush1.msra.mxu0 0.0
    %309 = vmatprep.subr.mxu0 0.0
    %310 = vmatpush1.msra.mxu0 0.0
    %311 = vmatprep.subr.mxu0 0.0
    %312 = vmatpush1.msra.mxu0 0.0
    %313 = vmatprep.subr.mxu0 0.0
    %314 = vmatpush1.msra.mxu0 0.0
    %315 = vmatprep.subr.mxu0 0.0
    %316 = vmatpush1.msra.mxu0 0.0
    %317 = vmatprep.subr.mxu0 0.0
    %318 = vmatpush1.msra.mxu0 0.0
    %319 = vmatprep.subr.mxu0 0.0
    %320 = vmatpush1.msra.mxu0 0.0
    %321 = vmatprep.subr.mxu0 0.0
    %322 = vmatpush1.msra.mxu0 0.0
    %323 = vmatprep.subr.mxu0 0.0
    %324 = vmatpush1.msra.mxu0 0.0
    %325 = vmatprep.subr.mxu0 0.0
    %326 = vmatpush1.msra.mxu0 0.0
    %327 = vmatprep.subr.mxu0 0.0
    %328 = vmatpush1.msra.mxu0 0.0
    %329 = vmatprep.subr.mxu0 0.0
    %330 = vmatpush1.msra.mxu0 0.0
    %331 = vmatprep.subr.mxu0 0.0
    %332 = vmatpush1.msra.mxu0 0.0
    %333 = vmatprep.subr.mxu0 0.0
    %334 = vmatpush1.msra.mxu0 0.0
    %335 = vmatprep.subr.mxu0 0.0
    %336 = vmatpush1.msra.mxu0 0.0
    %337 = vmatprep.subr.mxu0 0.0
    %338 = vmatpush1.msra.mxu0 0.0
    %339 = vmatprep.subr.mxu0 0.0
    %340 = vmatpush1.msra.mxu0 0.0
    %341 = vmatprep.subr.mxu0 0.0
    %342 = vmatpush1.msra.mxu0 0.0
    %343 = vmatprep.subr.mxu0 0.0
    %344 = vmatpush1.msra.mxu0 0.0
    %345 = vmatprep.subr.mxu0 0.0
    %346 = vmatpush1.msra.mxu0 0.0
    %347 = vmatprep.subr.mxu0 0.0
    %348 = vmatpush1.msra.mxu0 0.0
    %349 = vmatprep.mubr.f32.mxu0 0.0
    %350 = vmatmul.mubr.f32.gmra.mrb[0].mxu0 %v149
    %v351 = vpop.f32.mrb[0].mxu0
    %v352 = vadd.f32 %v118, %v351
    %v353 = vpop.f32.mrb[0].mxu0
    %v354 = vadd.f32 %v122, %v353
    %355 = vmatprep.mubr.f32.mxu0 0.0
    %356 = vmatmul.mubr.f32.gmra.mrb[0].mxu0 %v152
    %v357 = vpop.f32.mrb[0].mxu0
    %v358 = vadd.f32 %v118, %v357
    %v359 = vpop.f32.mrb[0].mxu0
    %v360 = vadd.f32 %v122, %v359
    %361 = vmatprep.mubr.f32.mxu0 0.0
    %362 = vmatmul.mubr.f32.gmra.mrb[0].mxu0 %v155
    %v363 = vpop.f32.mrb[0].mxu0
    %v364 = vadd.f32 %v118, %v363
    %v365 = vpop.f32.mrb[0].mxu0
    %v366 = vadd.f32 %v122, %v365
    %367 = vmatprep.mubr.f32.mxu0 0.0
    %368 = vmatmul.mubr.f32.gmra.mrb[0].mxu0 %v158
    %v369 = vpop.f32.mrb[0].mxu0
    %v370 = vadd.f32 %v118, %v369
    %v371 = vpop.f32.mrb[0].mxu0
    %v372 = vadd.f32 %v122, %v371
    %373 = vmatprep.mubr.f32.mxu0 0.0
    %374 = vmatmul.mubr.f32.gmra.mrb[0].mxu0 %v161
    %v375 = vpop.f32.mrb[0].mxu0
    %v376 = vadd.f32 %v118, %v375
    %v377 = vpop.f32.mrb[0].mxu0
    %v378 = vadd.f32 %v122, %v377
    %379 = vmatprep.mubr.f32.mxu0 0.0
    %380 = vmatmul.mubr.f32.gmra.mrb[0].mxu0 %v164
    %v381 = vpop.f32.mrb[0].mxu0
    %v382 = vadd.f32 %v118, %v381
    %v383 = vpop.f32.mrb[0].mxu0
    %v384 = vadd.f32 %v122, %v383
    %385 = vmatprep.mubr.f32.mxu0 0.0
    %386 = vmatmul.mubr.f32.gmra.mrb[0].mxu0 %v167
    %v387 = vpop.f32.mrb[0].mxu0
    %v388 = vadd.f32 %v118, %v387
    %v389 = vpop.f32.mrb[0].mxu0
    %v390 = vadd.f32 %v122, %v389
    %391 = vmatprep.mubr.f32.mxu0 0.0
    %392 = vmatmul.mubr.f32.gmra.mrb[0].mxu0 %v170
    %v393 = vpop.f32.mrb[0].mxu0
    %v394 = vadd.f32 %v118, %v393
    %v395 = vpop.f32.mrb[0].mxu0
    %v396 = vadd.f32 %v122, %v395
    %397 = vdwg.mxu0
    %398 = vmatprep.subr.mxu0 %v62
    %399 = vmatpush1.msra.mxu0 %v61
    %400 = vmatprep.subr.mxu0 %v70
    %401 = vmatpush1.msra.mxu0 %v69
    %402 = vmatprep.subr.mxu0 %v78
    %403 = vmatpush1.msra.mxu0 %v77
    %404 = vmatprep.subr.mxu0 %v86
    %405 = vmatpush1.msra.mxu0 %v85
    %406 = vmatprep.subr.mxu0 %v94
    %407 = vmatpush1.msra.mxu0 %v93
    %408 = vmatprep.subr.mxu0 %v102
    %409 = vmatpush1.msra.mxu0 %v101
    %410 = vmatprep.subr.mxu0 0.0
    %411 = vmatpush1.msra.mxu0 0.0
    %412 = vmatprep.subr.mxu0 0.0
    %413 = vmatpush1.msra.mxu0 0.0
    %414 = vmatprep.subr.mxu0 0.0
    %415 = vmatpush1.msra.mxu0 0.0
    %416 = vmatprep.subr.mxu0 0.0
    %417 = vmatpush1.msra.mxu0 0.0
    %418 = vmatprep.subr.mxu0 0.0
    %419 = vmatpush1.msra.mxu0 0.0
    %420 = vmatprep.subr.mxu0 0.0
    %421 = vmatpush1.msra.mxu0 0.0
    %422 = vmatprep.subr.mxu0 0.0
    %423 = vmatpush1.msra.mxu0 0.0
    %424 = vmatprep.subr.mxu0 0.0
    %425 = vmatpush1.msra.mxu0 0.0
    %426 = vmatprep.subr.mxu0 0.0
    %427 = vmatpush1.msra.mxu0 0.0
    %428 = vmatprep.subr.mxu0 0.0
    %429 = vmatpush1.msra.mxu0 0.0
    %430 = vmatprep.subr.mxu0 0.0
    %431 = vmatpush1.msra.mxu0 0.0
    %432 = vmatprep.subr.mxu0 0.0
    %433 = vmatpush1.msra.mxu0 0.0
    %434 = vmatprep.subr.mxu0 0.0
    %435 = vmatpush1.msra.mxu0 0.0
    %436 = vmatprep.subr.mxu0 0.0
    %437 = vmatpush1.msra.mxu0 0.0
    %438 = vmatprep.subr.mxu0 0.0
    %439 = vmatpush1.msra.mxu0 0.0
    %440 = vmatprep.subr.mxu0 0.0
    %441 = vmatpush1.msra.mxu0 0.0
    %442 = vmatprep.subr.mxu0 0.0
    %443 = vmatpush1.msra.mxu0 0.0
    %444 = vmatprep.subr.mxu0 0.0
    %445 = vmatpush1.msra.mxu0 0.0
    %446 = vmatprep.subr.mxu0 0.0
    %447 = vmatpush1.msra.mxu0 0.0
    %448 = vmatprep.subr.mxu0 0.0
    %449 = vmatpush1.msra.mxu0 0.0
    %450 = vmatprep.subr.mxu0 0.0
    %451 = vmatpush1.msra.mxu0 0.0
    %452 = vmatprep.subr.mxu0 0.0
    %453 = vmatpush1.msra.mxu0 0.0
    %454 = vmatprep.subr.mxu0 0.0
    %455 = vmatpush1.msra.mxu0 0.0
    %456 = vmatprep.subr.mxu0 0.0
    %457 = vmatpush1.msra.mxu0 0.0
    %458 = vmatprep.subr.mxu0 0.0
    %459 = vmatpush1.msra.mxu0 0.0
    %460 = vmatprep.subr.mxu0 0.0
    %461 = vmatpush1.msra.mxu0 0.0
    %462 = vmatprep.mubr.f32.mxu0 0.0
    %463 = vmatmul.mubr.f32.gmra.mrb[0].mxu0 %v149
    %v464 = vpop.f32.mrb[0].mxu0
    %v465 = vadd.f32 %v126, %v464
    %v466 = vpop.f32.mrb[0].mxu0
    %v467 = vadd.f32 %v130, %v466
    %468 = vmatprep.mubr.f32.mxu0 0.0
    %469 = vmatmul.mubr.f32.gmra.mrb[0].mxu0 %v152
    %v470 = vpop.f32.mrb[0].mxu0
    %v471 = vadd.f32 %v126, %v470
    %v472 = vpop.f32.mrb[0].mxu0
    %v473 = vadd.f32 %v130, %v472
    %474 = vmatprep.mubr.f32.mxu0 0.0
    %475 = vmatmul.mubr.f32.gmra.mrb[0].mxu0 %v155
    %v476 = vpop.f32.mrb[0].mxu0
    %v477 = vadd.f32 %v126, %v476
    %v478 = vpop.f32.mrb[0].mxu0
    %v479 = vadd.f32 %v130, %v478
    %480 = vmatprep.mubr.f32.mxu0 0.0
    %481 = vmatmul.mubr.f32.gmra.mrb[0].mxu0 %v158
    %v482 = vpop.f32.mrb[0].mxu0
    %v483 = vadd.f32 %v126, %v482
    %v484 = vpop.f32.mrb[0].mxu0
    %v485 = vadd.f32 %v130, %v484
    %486 = vmatprep.mubr.f32.mxu0 0.0
    %487 = vmatmul.mubr.f32.gmra.mrb[0].mxu0 %v161
    %v488 = vpop.f32.mrb[0].mxu0
    %v489 = vadd.f32 %v126, %v488
    %v490 = vpop.f32.mrb[0].mxu0
    %v491 = vadd.f32 %v130, %v490
    %492 = vmatprep.mubr.f32.mxu0 0.0
    %493 = vmatmul.mubr.f32.gmra.mrb[0].mxu0 %v164
    %v494 = vpop.f32.mrb[0].mxu0
    %v495 = vadd.f32 %v126, %v494
    %v496 = vpop.f32.mrb[0].mxu0
    %v497 = vadd.f32 %v130, %v496
    %498 = vmatprep.mubr.f32.mxu0 0.0
    %499 = vmatmul.mubr.f32.gmra.mrb[0].mxu0 %v167
    %v500 = vpop.f32.mrb[0].mxu0
    %v501 = vadd.f32 %v126, %v500
    %v502 = vpop.f32.mrb[0].mxu0
    %v503 = vadd.f32 %v130, %v502
    %504 = vmatprep.mubr.f32.mxu0 0.0
    %505 = vmatmul.mubr.f32.gmra.mrb[0].mxu0 %v170
    %v506 = vpop.f32.mrb[0].mxu0
    %v507 = vadd.f32 %v126, %v506
    %v508 = vpop.f32.mrb[0].mxu0
    %v509 = vadd.f32 %v130, %v508
    %510 = vdwg.mxu0
    %511 = vmatprep.subr.mxu0 %v64
    %512 = vmatpush1.msra.mxu0 %v63
    %513 = vmatprep.subr.mxu0 %v72
    %514 = vmatpush1.msra.mxu0 %v71
    %515 = vmatprep.subr.mxu0 %v80
    %516 = vmatpush1.msra.mxu0 %v79
    %517 = vmatprep.subr.mxu0 %v88
    %518 = vmatpush1.msra.mxu0 %v87
    %519 = vmatprep.subr.mxu0 %v96
    %520 = vmatpush1.msra.mxu0 %v95
    %521 = vmatprep.subr.mxu0 %v104
    %522 = vmatpush1.msra.mxu0 %v103
    %523 = vmatprep.subr.mxu0 0.0
    %524 = vmatpush1.msra.mxu0 0.0
    %525 = vmatprep.subr.mxu0 0.0
    %526 = vmatpush1.msra.mxu0 0.0
    %527 = vmatprep.subr.mxu0 0.0
    %528 = vmatpush1.msra.mxu0 0.0
    %529 = vmatprep.subr.mxu0 0.0
    %530 = vmatpush1.msra.mxu0 0.0
    %531 = vmatprep.subr.mxu0 0.0
    %532 = vmatpush1.msra.mxu0 0.0
    %533 = vmatprep.subr.mxu0 0.0
    %534 = vmatpush1.msra.mxu0 0.0
    %535 = vmatprep.subr.mxu0 0.0
    %536 = vmatpush1.msra.mxu0 0.0
    %537 = vmatprep.subr.mxu0 0.0
    %538 = vmatpush1.msra.mxu0 0.0
    %539 = vmatprep.subr.mxu0 0.0
    %540 = vmatpush1.msra.mxu0 0.0
    %541 = vmatprep.subr.mxu0 0.0
    %542 = vmatpush1.msra.mxu0 0.0
    %543 = vmatprep.subr.mxu0 0.0
    %544 = vmatpush1.msra.mxu0 0.0
    %545 = vmatprep.subr.mxu0 0.0
    %546 = vmatpush1.msra.mxu0 0.0
    %547 = vmatprep.subr.mxu0 0.0
    %548 = vmatpush1.msra.mxu0 0.0
    %549 = vmatprep.subr.mxu0 0.0
    %550 = vmatpush1.msra.mxu0 0.0
    %551 = vmatprep.subr.mxu0 0.0
    %552 = vmatpush1.msra.mxu0 0.0
    %553 = vmatprep.subr.mxu0 0.0
    %554 = vmatpush1.msra.mxu0 0.0
    %555 = vmatprep.subr.mxu0 0.0
    %556 = vmatpush1.msra.mxu0 0.0
    %557 = vmatprep.subr.mxu0 0.0
    %558 = vmatpush1.msra.mxu0 0.0
    %559 = vmatprep.subr.mxu0 0.0
    %560 = vmatpush1.msra.mxu0 0.0
    %561 = vmatprep.subr.mxu0 0.0
    %562 = vmatpush1.msra.mxu0 0.0
    %563 = vmatprep.subr.mxu0 0.0
    %564 = vmatpush1.msra.mxu0 0.0
    %565 = vmatprep.subr.mxu0 0.0
    %566 = vmatpush1.msra.mxu0 0.0
    %567 = vmatprep.subr.mxu0 0.0
    %568 = vmatpush1.msra.mxu0 0.0
    %569 = vmatprep.subr.mxu0 0.0
    %570 = vmatpush1.msra.mxu0 0.0
    %571 = vmatprep.subr.mxu0 0.0
    %572 = vmatpush1.msra.mxu0 0.0
    %573 = vmatprep.subr.mxu0 0.0
    %574 = vmatpush1.msra.mxu0 0.0
    %575 = vmatprep.mubr.f32.mxu0 0.0
    %576 = vmatmul.mubr.f32.gmra.mrb[0].mxu0 %v149
    %v577 = vpop.f32.mrb[0].mxu0
    %v578 = vadd.f32 %v134, %v577
    %v579 = vpop.f32.mrb[0].mxu0
    %v580 = vadd.f32 %v138, %v579
    %581 = vmatprep.mubr.f32.mxu0 0.0
    %582 = vmatmul.mubr.f32.gmra.mrb[0].mxu0 %v152
    %v583 = vpop.f32.mrb[0].mxu0
    %v584 = vadd.f32 %v134, %v583
    %v585 = vpop.f32.mrb[0].mxu0
    %v586 = vadd.f32 %v138, %v585
    %587 = vmatprep.mubr.f32.mxu0 0.0
    %588 = vmatmul.mubr.f32.gmra.mrb[0].mxu0 %v155
    %v589 = vpop.f32.mrb[0].mxu0
    %v590 = vadd.f32 %v134, %v589
    %v591 = vpop.f32.mrb[0].mxu0
    %v592 = vadd.f32 %v138, %v591
    %593 = vmatprep.mubr.f32.mxu0 0.0
    %594 = vmatmul.mubr.f32.gmra.mrb[0].mxu0 %v158
    %v595 = vpop.f32.mrb[0].mxu0
    %v596 = vadd.f32 %v134, %v595
    %v597 = vpop.f32.mrb[0].mxu0
    %v598 = vadd.f32 %v138, %v597
    %599 = vmatprep.mubr.f32.mxu0 0.0
    %600 = vmatmul.mubr.f32.gmra.mrb[0].mxu0 %v161
    %v601 = vpop.f32.mrb[0].mxu0
    %v602 = vadd.f32 %v134, %v601
    %v603 = vpop.f32.mrb[0].mxu0
    %v604 = vadd.f32 %v138, %v603
    %605 = vmatprep.mubr.f32.mxu0 0.0
    %606 = vmatmul.mubr.f32.gmra.mrb[0].mxu0 %v164
    %v607 = vpop.f32.mrb[0].mxu0
    %v608 = vadd.f32 %v134, %v607
    %v609 = vpop.f32.mrb[0].mxu0
    %v610 = vadd.f32 %v138, %v609
    %611 = vmatprep.mubr.f32.mxu0 0.0
    %612 = vmatmul.mubr.f32.gmra.mrb[0].mxu0 %v167
    %v613 = vpop.f32.mrb[0].mxu0
    %v614 = vadd.f32 %v134, %v613
    %v615 = vpop.f32.mrb[0].mxu0
    %v616 = vadd.f32 %v138, %v615
    %617 = vmatprep.mubr.f32.mxu0 0.0
    %618 = vmatmul.mubr.f32.gmra.mrb[0].mxu0 %v170
    %v619 = vpop.f32.mrb[0].mxu0
    %v620 = vadd.f32 %v134, %v619
    %v621 = vpop.f32.mrb[0].mxu0
    %v622 = vadd.f32 %v138, %v621
    %623 = vdwg.mxu0
    %v624 = vmax.f32 %v239, %v465
    %v625 = vmax.f32 %v241, %v467
    %v626 = vmax.f32 %v352, %v578
    %v627 = vmax.f32 %v354, %v580
    %v628 = vmax.f32 %v245, %v471
    %v629 = vmax.f32 %v247, %v473
    %v630 = vmax.f32 %v358, %v584
    %v631 = vmax.f32 %v360, %v586
    %v632 = vmax.f32 %v251, %v477
    %v633 = vmax.f32 %v253, %v479
    %v634 = vmax.f32 %v364, %v590
    %v635 = vmax.f32 %v366, %v592
    %v636 = vmax.f32 %v257, %v483
    %v637 = vmax.f32 %v259, %v485
    %v638 = vmax.f32 %v370, %v596
    %v639 = vmax.f32 %v372, %v598
    %v640 = vmax.f32 %v263, %v489
    %v641 = vmax.f32 %v265, %v491
    %v642 = vmax.f32 %v376, %v602
    %v643 = vmax.f32 %v378, %v604
    %v644 = vmax.f32 %v269, %v495
    %v645 = vmax.f32 %v271, %v497
    %v646 = vmax.f32 %v382, %v608
    %v647 = vmax.f32 %v384, %v610
    %v648 = vmax.f32 %v275, %v501
    %v649 = vmax.f32 %v277, %v503
    %v650 = vmax.f32 %v388, %v614
    %v651 = vmax.f32 %v390, %v616
    %v652 = vmax.f32 %v281, %v507
    %v653 = vmax.f32 %v283, %v509
    %v654 = vmax.f32 %v394, %v620
    %v655 = vmax.f32 %v396, %v622
    %v656 = vld [vmem:[#allocation5] sm:$0xff]
    %v657 = vld [vmem:[#allocation5 + $0x8] sm:$0xff]
    %v658 = vld [vmem:[#allocation5 + $0x10] sm:$0xff]
    %v659 = vld [vmem:[#allocation5 + $0x18] sm:$0xff]
    %v660 = vld [vmem:[#allocation5 + $0x20] sm:$0xff]
    %v661 = vld [vmem:[#allocation5 + $0x28] sm:$0xff]
    %v662 = vld [vmem:[#allocation5 + $0x30] sm:$0xff]
    %v663 = vld [vmem:[#allocation5 + $0x38] sm:$0xff]
    %v664 = vld [vmem:[#allocation5 + $0x40] sm:$0xff]
    %v665 = vld [vmem:[#allocation5 + $0x48] sm:$0xff]
    %v666 = vld [vmem:[#allocation5 + $0x50] sm:$0xff]
    %v667 = vld [vmem:[#allocation5 + $0x58] sm:$0xff]
    %v668 = vld [vmem:[#allocation5 + $0x60] sm:$0xff]
    %v669 = vld [vmem:[#allocation5 + $0x68] sm:$0xff]
    %v670 = vld [vmem:[#allocation5 + $0x70] sm:$0xff]
    %v671 = vld [vmem:[#allocation5 + $0x78] sm:$0xff]
    %v672 = vld [vmem:[#allocation5 + $0x80] sm:$0xff]
    %v673 = vld [vmem:[#allocation5 + $0x88] sm:$0xff]
    %v674 = vld [vmem:[#allocation5 + $0x90] sm:$0xff]
    %v675 = vld [vmem:[#allocation5 + $0x98] sm:$0xff]
    %v676 = vld [vmem:[#allocation5 + $0xa0] sm:$0xff]
    %v677 = vld [vmem:[#allocation5 + $0xa8] sm:$0xff]
    %v678 = vld [vmem:[#allocation5 + $0xb0] sm:$0xff]
    %v679 = vld [vmem:[#allocation5 + $0xb8] sm:$0xff]
    %v680 = vld [vmem:[#allocation5 + $0xc0] sm:$0xff]
    %v681 = vld [vmem:[#allocation5 + $0xc8] sm:$0xff]
    %v682 = vld [vmem:[#allocation5 + $0xd0] sm:$0xff]
    %v683 = vld [vmem:[#allocation5 + $0xd8] sm:$0xff]
    %v684 = vld [vmem:[#allocation5 + $0xe0] sm:$0xff]
    %v685 = vld [vmem:[#allocation5 + $0xe8] sm:$0xff]
    %v686 = vld [vmem:[#allocation5 + $0xf0] sm:$0xff]
    %v687 = vld [vmem:[#allocation5 + $0xf8] sm:$0xff]
    %v688 = vld [vmem:[#allocation5 + $0x100] sm:$0xff]
    %v689 = vld [vmem:[#allocation5 + $0x108] sm:$0xff]
    %v690 = vld [vmem:[#allocation5 + $0x110] sm:$0xff]
    %v691 = vld [vmem:[#allocation5 + $0x118] sm:$0xff]
    %v692 = vld [vmem:[#allocation5 + $0x120] sm:$0xff]
    %v693 = vld [vmem:[#allocation5 + $0x128] sm:$0xff]
    %v694 = vld [vmem:[#allocation5 + $0x130] sm:$0xff]
    %v695 = vld [vmem:[#allocation5 + $0x138] sm:$0xff]
    %v696 = vld [vmem:[#allocation5 + $0x140] sm:$0xff]
    %v697 = vld [vmem:[#allocation5 + $0x148] sm:$0xff]
    %v698 = vld [vmem:[#allocation5 + $0x150] sm:$0xff]
    %v699 = vld [vmem:[#allocation5 + $0x158] sm:$0xff]
    %v700 = vld [vmem:[#allocation5 + $0x160] sm:$0xff]
    %v701 = vld [vmem:[#allocation5 + $0x168] sm:$0xff]
    %v702 = vld [vmem:[#allocation5 + $0x170] sm:$0xff]
    %v703 = vld [vmem:[#allocation5 + $0x178] sm:$0xff]
    %v704 = vld [vmem:[#allocation5 + $0x180] sm:$0xff]
    %v705 = vld [vmem:[#allocation5 + $0x188] sm:$0xff]
    %v706 = vld [vmem:[#allocation5 + $0x190] sm:$0xff]
    %v707 = vld [vmem:[#allocation5 + $0x198] sm:$0xff]
    %v708 = vld [vmem:[#allocation5 + $0x1a0] sm:$0xff]
    %v709 = vld [vmem:[#allocation5 + $0x1a8] sm:$0xff]
    %v710 = vld [vmem:[#allocation5 + $0x1b0] sm:$0xff]
    %v711 = vld [vmem:[#allocation5 + $0x1b8] sm:$0xff]
    %v712 = vld [vmem:[#allocation5 + $0x1c0] sm:$0xff]
    %v713 = vld [vmem:[#allocation5 + $0x1c8] sm:$0xff]
    %v714 = vld [vmem:[#allocation5 + $0x1d0] sm:$0xff]
    %v715 = vld [vmem:[#allocation5 + $0x1d8] sm:$0xff]
    %v716 = vld [vmem:[#allocation5 + $0x1e0] sm:$0xff]
    %v717 = vld [vmem:[#allocation5 + $0x1e8] sm:$0xff]
    %v718 = vld [vmem:[#allocation5 + $0x1f0] sm:$0xff]
    %v719 = vld [vmem:[#allocation5 + $0x1f8] sm:$0xff]
    %v720 = vld [vmem:[%s4] sm:$0x1]
    %v722 = vlaneseq
    %v723 = vshrl.u32 %v722, 7
    %v724 = vsub.s32 0, %v723
    %v725 = vrot.slane %v720, %v724
    %727 = vmatprep.subr.mxu0 0.0
    %728 = vmatpush1.msra.mxu0 %v656
    %729 = vmatprep.subr.mxu0 0.0
    %730 = vmatpush1.msra.mxu0 %v657
    %731 = vmatprep.subr.mxu0 0.0
    %732 = vmatpush1.msra.mxu0 %v658
    %733 = vmatprep.subr.mxu0 0.0
    %734 = vmatpush1.msra.mxu0 %v659
    %735 = vmatprep.subr.mxu0 0.0
    %736 = vmatpush1.msra.mxu0 %v660
    %737 = vmatprep.subr.mxu0 0.0
    %738 = vmatpush1.msra.mxu0 %v661
    %739 = vmatprep.subr.mxu0 0.0
    %740 = vmatpush1.msra.mxu0 %v662
    %741 = vmatprep.subr.mxu0 0.0
    %742 = vmatpush1.msra.mxu0 %v663
    %743 = vmatprep.subr.mxu0 0.0
    %744 = vmatpush1.msra.mxu0 %v664
    %745 = vmatprep.subr.mxu0 0.0
    %746 = vmatpush1.msra.mxu0 %v665
    %747 = vmatprep.subr.mxu0 0.0
    %748 = vmatpush1.msra.mxu0 %v666
    %749 = vmatprep.subr.mxu0 0.0
    %750 = vmatpush1.msra.mxu0 %v667
    %751 = vmatprep.subr.mxu0 0.0
    %752 = vmatpush1.msra.mxu0 %v668
    %753 = vmatprep.subr.mxu0 0.0
    %754 = vmatpush1.msra.mxu0 %v669
    %755 = vmatprep.subr.mxu0 0.0
    %756 = vmatpush1.msra.mxu0 %v670
    %757 = vmatprep.subr.mxu0 0.0
    %758 = vmatpush1.msra.mxu0 %v671
    %759 = vmatprep.subr.mxu0 0.0
    %760 = vmatpush1.msra.mxu0 %v672
    %761 = vmatprep.subr.mxu0 0.0
    %762 = vmatpush1.msra.mxu0 %v673
    %763 = vmatprep.subr.mxu0 0.0
    %764 = vmatpush1.msra.mxu0 %v674
    %765 = vmatprep.subr.mxu0 0.0
    %766 = vmatpush1.msra.mxu0 %v675
    %767 = vmatprep.subr.mxu0 0.0
    %768 = vmatpush1.msra.mxu0 %v676
    %769 = vmatprep.subr.mxu0 0.0
    %770 = vmatpush1.msra.mxu0 %v677
    %771 = vmatprep.subr.mxu0 0.0
    %772 = vmatpush1.msra.mxu0 %v678
    %773 = vmatprep.subr.mxu0 0.0
    %774 = vmatpush1.msra.mxu0 %v679
    %775 = vmatprep.subr.mxu0 0.0
    %776 = vmatpush1.msra.mxu0 %v680
    %777 = vmatprep.subr.mxu0 0.0
    %778 = vmatpush1.msra.mxu0 %v681
    %779 = vmatprep.subr.mxu0 0.0
    %780 = vmatpush1.msra.mxu0 %v682
    %781 = vmatprep.subr.mxu0 0.0
    %782 = vmatpush1.msra.mxu0 %v683
    %783 = vmatprep.subr.mxu0 0.0
    %784 = vmatpush1.msra.mxu0 %v684
    %785 = vmatprep.subr.mxu0 0.0
    %786 = vmatpush1.msra.mxu0 %v685
    %787 = vmatprep.subr.mxu0 0.0
    %788 = vmatpush1.msra.mxu0 %v686
    %789 = vmatprep.subr.mxu0 0.0
    %790 = vmatpush1.msra.mxu0 %v687
    %791 = vmatprep.mubr.f32.mxu0 %v625
    %792 = vmatmul.mubr.f32.gmra.mrb[0].mxu0 %v624
    %v793 = vpop.f32.mrb[0].mxu0
    %v794 = vadd.f32 %v725, %v793
    %v795 = vpop.f32.mrb[0].mxu0
    %796 = vmatprep.mubr.f32.mxu0 %v629
    %797 = vmatmul.mubr.f32.gmra.mrb[0].mxu0 %v628
    %v798 = vpop.f32.mrb[0].mxu0
    %v799 = vadd.f32 %v725, %v798
    %v800 = vpop.f32.mrb[0].mxu0
    %801 = vmatprep.mubr.f32.mxu0 %v633
    %802 = vmatmul.mubr.f32.gmra.mrb[0].mxu0 %v632
    %v803 = vpop.f32.mrb[0].mxu0
    %v804 = vadd.f32 %v725, %v803
    %v805 = vpop.f32.mrb[0].mxu0
    %806 = vmatprep.mubr.f32.mxu0 %v637
    %807 = vmatmul.mubr.f32.gmra.mrb[0].mxu0 %v636
    %v808 = vpop.f32.mrb[0].mxu0
    %v809 = vadd.f32 %v725, %v808
    %v810 = vpop.f32.mrb[0].mxu0
    %811 = vmatprep.mubr.f32.mxu0 %v641
    %812 = vmatmul.mubr.f32.gmra.mrb[0].mxu0 %v640
    %v813 = vpop.f32.mrb[0].mxu0
    %v814 = vadd.f32 %v725, %v813
    %v815 = vpop.f32.mrb[0].mxu0
    %816 = vmatprep.mubr.f32.mxu0 %v645
    %817 = vmatmul.mubr.f32.gmra.mrb[0].mxu0 %v644
    %v818 = vpop.f32.mrb[0].mxu0
    %v819 = vadd.f32 %v725, %v818
    %v820 = vpop.f32.mrb[0].mxu0
    %821 = vmatprep.mubr.f32.mxu0 %v649
    %822 = vmatmul.mubr.f32.gmra.mrb[0].mxu0 %v648
    %v823 = vpop.f32.mrb[0].mxu0
    %v824 = vadd.f32 %v725, %v823
    %v825 = vpop.f32.mrb[0].mxu0
    %826 = vmatprep.mubr.f32.mxu0 %v653
    %827 = vmatmul.mubr.f32.gmra.mrb[0].mxu0 %v652
    %v828 = vpop.f32.mrb[0].mxu0
    %v829 = vadd.f32 %v725, %v828
    %v830 = vpop.f32.mrb[0].mxu0
    %831 = vdwg.mxu0
    %832 = vmatprep.subr.mxu0 0.0
    %833 = vmatpush1.msra.mxu0 %v688
    %834 = vmatprep.subr.mxu0 0.0
    %835 = vmatpush1.msra.mxu0 %v689
    %836 = vmatprep.subr.mxu0 0.0
    %837 = vmatpush1.msra.mxu0 %v690
    %838 = vmatprep.subr.mxu0 0.0
    %839 = vmatpush1.msra.mxu0 %v691
    %840 = vmatprep.subr.mxu0 0.0
    %841 = vmatpush1.msra.mxu0 %v692
    %842 = vmatprep.subr.mxu0 0.0
    %843 = vmatpush1.msra.mxu0 %v693
    %844 = vmatprep.subr.mxu0 0.0
    %845 = vmatpush1.msra.mxu0 %v694
    %846 = vmatprep.subr.mxu0 0.0
    %847 = vmatpush1.msra.mxu0 %v695
    %848 = vmatprep.subr.mxu0 0.0
    %849 = vmatpush1.msra.mxu0 %v696
    %850 = vmatprep.subr.mxu0 0.0
    %851 = vmatpush1.msra.mxu0 %v697
    %852 = vmatprep.subr.mxu0 0.0
    %853 = vmatpush1.msra.mxu0 %v698
    %854 = vmatprep.subr.mxu0 0.0
    %855 = vmatpush1.msra.mxu0 %v699
    %856 = vmatprep.subr.mxu0 0.0
    %857 = vmatpush1.msra.mxu0 %v700
    %858 = vmatprep.subr.mxu0 0.0
    %859 = vmatpush1.msra.mxu0 %v701
    %860 = vmatprep.subr.mxu0 0.0
    %861 = vmatpush1.msra.mxu0 %v702
    %862 = vmatprep.subr.mxu0 0.0
    %863 = vmatpush1.msra.mxu0 %v703
    %864 = vmatprep.subr.mxu0 0.0
    %865 = vmatpush1.msra.mxu0 %v704
    %866 = vmatprep.subr.mxu0 0.0
    %867 = vmatpush1.msra.mxu0 %v705
    %868 = vmatprep.subr.mxu0 0.0
    %869 = vmatpush1.msra.mxu0 %v706
    %870 = vmatprep.subr.mxu0 0.0
    %871 = vmatpush1.msra.mxu0 %v707
    %872 = vmatprep.subr.mxu0 0.0
    %873 = vmatpush1.msra.mxu0 %v708
    %874 = vmatprep.subr.mxu0 0.0
    %875 = vmatpush1.msra.mxu0 %v709
    %876 = vmatprep.subr.mxu0 0.0
    %877 = vmatpush1.msra.mxu0 %v710
    %878 = vmatprep.subr.mxu0 0.0
    %879 = vmatpush1.msra.mxu0 %v711
    %880 = vmatprep.subr.mxu0 0.0
    %881 = vmatpush1.msra.mxu0 %v712
    %882 = vmatprep.subr.mxu0 0.0
    %883 = vmatpush1.msra.mxu0 %v713
    %884 = vmatprep.subr.mxu0 0.0
    %885 = vmatpush1.msra.mxu0 %v714
    %886 = vmatprep.subr.mxu0 0.0
    %887 = vmatpush1.msra.mxu0 %v715
    %888 = vmatprep.subr.mxu0 0.0
    %889 = vmatpush1.msra.mxu0 %v716
    %890 = vmatprep.subr.mxu0 0.0
    %891 = vmatpush1.msra.mxu0 %v717
    %892 = vmatprep.subr.mxu0 0.0
    %893 = vmatpush1.msra.mxu0 %v718
    %894 = vmatprep.subr.mxu0 0.0
    %895 = vmatpush1.msra.mxu0 %v719
    %896 = vmatprep.mubr.f32.mxu0 %v627
    %897 = vmatmul.mubr.f32.gmra.mrb[0].mxu0 %v626
    %v898 = vpop.f32.mrb[0].mxu0
    %v899 = vadd.f32 %v794, %v898
    %v900 = vpop.f32.mrb[0].mxu0
    %901 = vmatprep.mubr.f32.mxu0 %v631
    %902 = vmatmul.mubr.f32.gmra.mrb[0].mxu0 %v630
    %v903 = vpop.f32.mrb[0].mxu0
    %v904 = vadd.f32 %v799, %v903
    %v905 = vpop.f32.mrb[0].mxu0
    %906 = vmatprep.mubr.f32.mxu0 %v635
    %907 = vmatmul.mubr.f32.gmra.mrb[0].mxu0 %v634
    %v908 = vpop.f32.mrb[0].mxu0
    %v909 = vadd.f32 %v804, %v908
    %v910 = vpop.f32.mrb[0].mxu0
    %911 = vmatprep.mubr.f32.mxu0 %v639
    %912 = vmatmul.mubr.f32.gmra.mrb[0].mxu0 %v638
    %v913 = vpop.f32.mrb[0].mxu0
    %v914 = vadd.f32 %v809, %v913
    %v915 = vpop.f32.mrb[0].mxu0
    %916 = vmatprep.mubr.f32.mxu0 %v643
    %917 = vmatmul.mubr.f32.gmra.mrb[0].mxu0 %v642
    %v918 = vpop.f32.mrb[0].mxu0
    %v919 = vadd.f32 %v814, %v918
    %v920 = vpop.f32.mrb[0].mxu0
    %921 = vmatprep.mubr.f32.mxu0 %v647
    %922 = vmatmul.mubr.f32.gmra.mrb[0].mxu0 %v646
    %v923 = vpop.f32.mrb[0].mxu0
    %v924 = vadd.f32 %v819, %v923
    %v925 = vpop.f32.mrb[0].mxu0
    %926 = vmatprep.mubr.f32.mxu0 %v651
    %927 = vmatmul.mubr.f32.gmra.mrb[0].mxu0 %v650
    %v928 = vpop.f32.mrb[0].mxu0
    %v929 = vadd.f32 %v824, %v928
    %v930 = vpop.f32.mrb[0].mxu0
    %931 = vmatprep.mubr.f32.mxu0 %v655
    %932 = vmatmul.mubr.f32.gmra.mrb[0].mxu0 %v654
    %v933 = vpop.f32.mrb[0].mxu0
    %v934 = vadd.f32 %v829, %v933
    %v935 = vpop.f32.mrb[0].mxu0
    %936 = vdwg.mxu0
    %937 = vst [vmem:[#allocation7] sm:$0xff] %v899
    %938 = vst [vmem:[#allocation7 + $0x8] sm:$0xff] %v904
    %939 = vst [vmem:[#allocation7 + $0x10] sm:$0xff] %v909
    %940 = vst [vmem:[#allocation7 + $0x18] sm:$0xff] %v914
    %941 = vst [vmem:[#allocation7 + $0x20] sm:$0xff] %v919
    %942 = vst [vmem:[#allocation7 + $0x28] sm:$0xff] %v924
    %943 = vst [vmem:[#allocation7 + $0x30] sm:$0xff] %v929
    %944 = vst [vmem:[#allocation7 + $0x38] sm:$0xff] %v934
    // Predicated region
    $region30: #{tpu_custom_call.1} parent=1 // pred_check
      _
    $region31: #{tpu_custom_call.1} parent=1 // pred_check_branch
      %946 = sbr.rel (0) target = $region33
    $region32: #{tpu_custom_call.1} parent=1 // pred_region
      %s948 = ssub.s32 1024, 1024
      %949 = vsyncadd [#allocation4], %s948
      %s950 = sshll.u32 [#allocation7], 4
      %s951 = int_to_ptr.vmem [resolvable:$true] %s950
      %956 = dma.vmem_to_hbm [thread:$0]  %s951, 1024, %s5, [#allocation4], 128, 128, 8
    $region33: #{tpu_custom_call.1} parent=1 // pred_fallthru
      _
    // Predicated region
    $region34: #{tpu_custom_call.1} parent=1 // pred_check
      _
    $region35: #{tpu_custom_call.1} parent=1 // pred_check_branch
      %958 = sbr.rel (0) target = $region37
    $region36: #{tpu_custom_call.1} parent=1 // pred_region
      %959 = dma.done [#allocation4], 1024
    $region37: #{tpu_custom_call.1} parent=1 // pred_fallthru
      _
    %960 = vsyncpa [#allocation3], 1
    %961 = vsyncpa [#allocation6], 1
    %962 = vsyncpa [#allocation4], 1

</llo_original>
